<compile_context>
chip_gen: v5e
topology: v5e:2x2
jax: 0.10.0
libtpu: 0.0.40
codegen_flags: <defaults>
</compile_context>

<pallas_src>
import functools

import jax
import jax.numpy as jnp
from jax import lax
from jax.experimental import pallas as pl
from jax.experimental.pallas import tpu as pltpu

_NEG_INF = -1e30
_LANE = 128


def attention_flow_kernel(c_ref, q_ref, w_ref, bias_ref, o_ref, *,
                          q_len, mxu_bf16):
    c = c_ref[0]                 # (C, Dp)     Dp = 2*d padded to 128 lanes
    q = q_ref[0]                 # (Qp, Dp)    Qp = q_len padded to 128 lanes
    w = w_ref[...]               # (3, Dp)     rows: weight_c, weight_q, weight_cq
    wc = w[0:1, :]               # (1, Dp)
    wq = w[1:2, :]
    wcq = w[2:3, :]
    bc = bias_ref[0]             # scalars from SMEM
    bq = bias_ref[1]
    bcq = bias_ref[2]

    C, Dp = c.shape
    Qp = q.shape[0]

    mxu_dt = jnp.bfloat16 if mxu_bf16 else jnp.float32

    cf = c.astype(jnp.float32)
    qf = q.astype(jnp.float32)
    c_mxu = c.astype(mxu_dt)
    q_mxu = q.astype(mxu_dt)

    # Rank-1 context term: VPU multiply + lane reduce -> (C, 1).
    sc = jnp.sum(cf * wc, axis=-1, keepdims=True) + bc               # (C, 1)

    # Rank-1 query term, produced lane-dense as a row (no XLU transpose):
    # contract feature dims of (1, Dp) and (Qp, Dp) -> (1, Qp).
    sq = lax.dot_general(wq, qf, (((1,), (1,)), ((), ())),
                         preferred_element_type=jnp.float32) + bq    # (1, Qp)

    # Trilinear term on the MXU; fold wcq into q (Q << C), contract the
    # feature dim of BOTH operands (no explicit q.T).
    qw_mxu = (qf * wcq).astype(mxu_dt)                               # (Qp, Dp)
    cq = lax.dot_general(c_mxu, qw_mxu, (((1,), (1,)), ((), ())),
                         preferred_element_type=jnp.float32) + bcq   # (C, Qp)

    s = cq + sc + sq                                                 # (C, Qp) f32

    # Mask padded q columns (keep the mask on the f32 accumulator).
    if Qp != q_len:
        col = lax.broadcasted_iota(jnp.int32, (1, Qp), 1)
        s = jnp.where(col < q_len, s, _NEG_INF)

    # a = softmax(s, axis=-1); c2q = a @ q.  reciprocal-multiply normalize,
    # scale fused into the bf16 cast feeding the MXU.
    s_max = jnp.max(s, axis=-1, keepdims=True)                       # (C, 1)
    p = jnp.exp(s - s_max)                                           # (C, Qp)
    inv_row = pl.reciprocal(jnp.sum(p, axis=-1, keepdims=True), approx=True)
    a_mxu = (p * inv_row).astype(mxu_dt)                             # (C, Qp)
    c2q = jnp.dot(a_mxu, q_mxu, preferred_element_type=jnp.float32)  # (C, Dp)

    # b = softmax over context of row-maxes; q2c = b^T @ c as an MXU
    # contraction over the context axis (no cross-sublane reduce).
    mm = jnp.max(s_max, axis=0, keepdims=True)                       # (1, 1)
    e = jnp.exp(s_max - mm)                                          # (C, 1)
    inv_col = pl.reciprocal(jnp.sum(e, axis=0, keepdims=True), approx=True)
    b = e * inv_col                                                  # (C, 1)
    q2c = lax.dot_general(b, cf, (((0,), (0,)), ((), ())),
                          preferred_element_type=jnp.float32)        # (1, Dp)

    # Four Dp-wide slab stores, each lane-dense (Dp % 128 == 0, aligned
    # static offsets) -- no (C, 4Dp) concat temp, no masked vst.
    dt = o_ref.dtype
    o_ref[0, :, 0:Dp] = c.astype(dt)
    o_ref[0, :, Dp:2 * Dp] = c2q.astype(dt)
    o_ref[0, :, 2 * Dp:3 * Dp] = (cf * c2q).astype(dt)
    o_ref[0, :, 3 * Dp:4 * Dp] = (cf * q2c).astype(dt)


def attention_flow(c, q, params, *, mxu_bf16=True, out_dtype=None):
    """c: (B, C, D), q: (B, Q, D); params = (wc, bc, wq, bq, wcq, bcq)."""
    B, C, D = c.shape
    _, Q, _ = q.shape
    wc, bc, wq, bq, wcq, bcq = params
    out_dtype = c.dtype if out_dtype is None else out_dtype

    # Pad the query length and the feature dim to lane multiples.  Padded q
    # columns are masked to -inf inside the kernel; padded feature columns
    # are zero in data and weights, so all contractions are exact.
    Q_pad = pl.cdiv(Q, _LANE) * _LANE
    D_pad = pl.cdiv(D, _LANE) * _LANE

    c_in = c if D_pad == D else jnp.pad(c, ((0, 0), (0, 0), (0, D_pad - D)))
    if Q_pad == Q and D_pad == D:
        q_in = q
    else:
        q_in = jnp.pad(q, ((0, 0), (0, Q_pad - Q), (0, D_pad - D)))

    w_all = jnp.concatenate([wc, wq, wcq], axis=0).astype(jnp.float32)  # (3, D)
    if D_pad != D:
        w_all = jnp.pad(w_all, ((0, 0), (0, D_pad - D)))                # (3, Dp)
    biases = jnp.stack([bc[0, 0], bq[0, 0], bcq[0, 0]]).astype(jnp.float32)

    kernel = functools.partial(attention_flow_kernel, q_len=Q,
                               mxu_bf16=mxu_bf16)

    out_bytes = B * C * 4 * D_pad * jnp.dtype(out_dtype).itemsize
    cost = pl.CostEstimate(
        flops=2 * 2 * B * C * Q_pad * D_pad + 2 * B * C * D_pad,
        transcendentals=B * C * (Q_pad + 1),
        bytes_accessed=(c_in.size * c_in.dtype.itemsize
                        + q_in.size * q_in.dtype.itemsize
                        + w_all.size * 4 + out_bytes))

    grid_spec = pltpu.PrefetchScalarGridSpec(
        num_scalar_prefetch=0,
        grid=(B,),
        in_specs=[
            pl.BlockSpec((1, C, D_pad), lambda b: (b, 0, 0)),           # c
            pl.BlockSpec((1, Q_pad, D_pad), lambda b: (b, 0, 0)),       # q (padded)
            pl.BlockSpec((3, D_pad), lambda b: (0, 0)),                 # stacked weights
            pl.BlockSpec(memory_space=pltpu.MemorySpace.SMEM),          # biases (scalars)
        ],
        out_specs=pl.BlockSpec((1, C, 4 * D_pad), lambda b: (b, 0, 0)),
    )

    out = pl.pallas_call(
        kernel,
        out_shape=jax.ShapeDtypeStruct((B, C, 4 * D_pad), out_dtype),
        grid_spec=grid_spec,
        compiler_params=pltpu.CompilerParams(
            dimension_semantics=("parallel",)),
        cost_estimate=cost,
    )(c_in, q_in, w_all, biases)

    if D_pad != D:
        # Strip feature padding: (B,C,4*Dp) -> (B,C,4,Dp) -> keep :D -> (B,C,4D).
        out = out.reshape(B, C, 4, D_pad)[..., :D].reshape(B, C, 4 * D)
    return out


def attention_flow_reference(c, q, params):
    """Pure-JAX re-statement of the PyTorch forward for verification."""
    wc, bc, wq, bq, wcq, bcq = params
    sc = c @ wc[0] + bc[0, 0]                                   # (B, C)
    sq = q @ wq[0] + bq[0, 0]                                   # (B, Q)
    cq = jnp.einsum('bjk,bik->bji', c * wcq[0], q) + bcq[0, 0]  # (B, C, Q)
    s = sc[:, :, None] + sq[:, None, :] + cq                    # (B, C, Q)
    a = jax.nn.softmax(s, axis=2)
    c2q = jnp.einsum('bji,bik->bjk', a, q)                      # (B, C, D)
    b = jax.nn.softmax(jnp.max(s, axis=2), axis=1)              # (B, C)
    q2c = jnp.einsum('bj,bjk->bk', b, c)[:, None, :]            # (B, 1, D)
    q2c = jnp.broadcast_to(q2c, c.shape)
    return jnp.concatenate([c, c2q, c * c2q, c * q2c], axis=-1)


if __name__ == "__main__":
    # Small shapes: batch=2, c_len=16, q_len=8, d=16 -> feature dim 2d=32.
    B, C, Q, d = 2, 16, 8, 16
    D = 2 * d

    key = jax.random.PRNGKey(0)
    kc, kq, k1, k2, k3, k4, k5, k6 = jax.random.split(key, 8)

    c = jax.random.normal(kc, (B, C, D), dtype=jnp.float32)
    q = jax.random.normal(kq, (B, Q, D), dtype=jnp.float32)

    # Deterministic parameter init (torch Linear weight shape is (1, 2d)).
    scale = 1.0 / jnp.sqrt(jnp.float32(D))
    wc = jax.random.uniform(k1, (1, D), jnp.float32, -scale, scale)
    bc = jax.random.uniform(k2, (1, 1), jnp.float32, -scale, scale)
    wq = jax.random.uniform(k3, (1, D), jnp.float32, -scale, scale)
    bq = jax.random.uniform(k4, (1, 1), jnp.float32, -scale, scale)
    wcq = jax.random.uniform(k5, (1, D), jnp.float32, -scale, scale)
    bcq = jax.random.uniform(k6, (1, 1), jnp.float32, -scale, scale)
    params = (wc, bc, wq, bq, wcq, bcq)

    out = attention_flow(c, q, params)      # mxu_bf16=True default
    out = jax.block_until_ready(out)

    ref = attention_flow_reference(c, q, params)
    assert out.shape == (B, C, 4 * D), out.shape
    # Tolerance accounts for bf16 MXU operands (f32 accumulation) and the EUP
    # approximate-reciprocal softmax normalize; structural bugs produce O(1)
    # errors and still trip this check.
    assert jnp.allclose(out, ref, rtol=5e-2, atol=5e-2), "mismatch vs reference"

    print("KERNEL_OK")
</pallas_src>

<mosaic_0001>
module attributes {stable_mosaic.version = 11 : i64} {
  func.func @attention_flow_kernel(%arg0: i32, %arg1: memref<1x16x128xf32, #tpu.memory_space<vmem>>, %arg2: memref<1x128x128xf32, #tpu.memory_space<vmem>>, %arg3: memref<3x128xf32, #tpu.memory_space<vmem>>, %arg4: memref<3xf32, #tpu.memory_space<smem>>, %arg5: memref<1x16x512xf32, #tpu.memory_space<vmem>>) attributes {dimension_semantics = [#tpu.dimension_semantics<parallel>], iteration_bounds = array<i64: 2>, scalar_prefetch = 0 : i64, scratch_operands = 0 : i64, tpu.core_type = #tpu.core_type<tc>, window_params = [{transform_indices = @transform_0, window_bounds = array<i64: 1, 16, 128>}, {transform_indices = @transform_1, window_bounds = array<i64: 1, 128, 128>}, {pipeline_mode = #tpu.pipeline_mode<synchronous>, transform_indices = @transform_2, window_bounds = array<i64: 3, 128>}, {transform_indices = @transform_3, window_bounds = array<i64: 3>}, {transform_indices = @transform_4, window_bounds = array<i64: 1, 16, 512>}]} {
    %c0 = arith.constant 0 : index
    %c0_0 = arith.constant 0 : index
    %c0_1 = arith.constant 0 : index
    %0 = vector.load %arg1[%c0, %c0_0, %c0_1] : memref<1x16x128xf32, #tpu.memory_space<vmem>>, vector<1x16x128xf32>
    %1 = vector.shape_cast %0 : vector<1x16x128xf32> to vector<16x128xf32>
    %c0_2 = arith.constant 0 : index
    %c0_3 = arith.constant 0 : index
    %c0_4 = arith.constant 0 : index
    %2 = vector.load %arg2[%c0_2, %c0_3, %c0_4] : memref<1x128x128xf32, #tpu.memory_space<vmem>>, vector<1x128x128xf32>
    %3 = vector.shape_cast %2 : vector<1x128x128xf32> to vector<128x128xf32>
    %c0_5 = arith.constant 0 : index
    %c0_6 = arith.constant 0 : index
    %4 = vector.load %arg3[%c0_5, %c0_6] : memref<3x128xf32, #tpu.memory_space<vmem>>, vector<3x128xf32>
    %5 = vector.extract_strided_slice %4 {offsets = [0, 0], sizes = [1, 128], strides = [1, 1]} : vector<3x128xf32> to vector<1x128xf32>
    %6 = vector.extract_strided_slice %4 {offsets = [1, 0], sizes = [1, 128], strides = [1, 1]} : vector<3x128xf32> to vector<1x128xf32>
    %7 = vector.extract_strided_slice %4 {offsets = [2, 0], sizes = [1, 128], strides = [1, 1]} : vector<3x128xf32> to vector<1x128xf32>
    %c0_7 = arith.constant 0 : index
    %8 = memref.load %arg4[%c0_7] : memref<3xf32, #tpu.memory_space<smem>>
    %c1 = arith.constant 1 : index
    %9 = memref.load %arg4[%c1] : memref<3xf32, #tpu.memory_space<smem>>
    %c2 = arith.constant 2 : index
    %10 = memref.load %arg4[%c2] : memref<3xf32, #tpu.memory_space<smem>>
    %11 = arith.truncf %1 : vector<16x128xf32> to vector<16x128xbf16>
    %12 = arith.truncf %3 : vector<128x128xf32> to vector<128x128xbf16>
    %13 = vector.broadcast %5 : vector<1x128xf32> to vector<16x128xf32>
    %14 = arith.mulf %1, %13 : vector<16x128xf32>
    %cst = arith.constant dense<0.000000e+00> : vector<16xf32>
    %15 = vector.multi_reduction <add>, %14, %cst [1] : vector<16x128xf32> to vector<16xf32>
    %16 = vector.shape_cast %15 : vector<16xf32> to vector<16x1xf32>
    %17 = vector.broadcast %8 : f32 to vector<16x1xf32>
    %18 = arith.addf %16, %17 : vector<16x1xf32>
    %cst_8 = arith.constant dense<0.000000e+00> : vector<1x128xf32>
    %19 = tpu.matmul %6, %3, %cst_8 {dimension_numbers = #tpu.dot_dimension_numbers<[1], [1], [0], [0], [0, 0, 1, 0], [], []>} : vector<1x128xf32>, vector<128x128xf32>, vector<1x128xf32> -> vector<1x128xf32>
    %20 = vector.broadcast %9 : f32 to vector<1x128xf32>
    %21 = arith.addf %19, %20 : vector<1x128xf32>
    %22 = vector.broadcast %7 : vector<1x128xf32> to vector<128x128xf32>
    %23 = arith.mulf %3, %22 : vector<128x128xf32>
    %24 = arith.truncf %23 : vector<128x128xf32> to vector<128x128xbf16>
    %cst_9 = arith.constant dense<0.000000e+00> : vector<16x128xf32>
    %25 = tpu.matmul %11, %24, %cst_9 {dimension_numbers = #tpu.dot_dimension_numbers<[1], [1], [0], [0], [0, 0, 1, 0], [], []>} : vector<16x128xbf16>, vector<128x128xbf16>, vector<16x128xf32> -> vector<16x128xf32>
    %26 = vector.broadcast %10 : f32 to vector<16x128xf32>
    %27 = arith.addf %25, %26 : vector<16x128xf32>
    %28 = vector.broadcast %18 : vector<16x1xf32> to vector<16x128xf32>
    %29 = arith.addf %27, %28 : vector<16x128xf32>
    %30 = vector.broadcast %21 : vector<1x128xf32> to vector<16x128xf32>
    %31 = arith.addf %29, %30 : vector<16x128xf32>
    %32 = tpu.iota {dimensions = array<i32: 1>} : vector<1x128xi32>
    %c8_i32 = arith.constant 8 : i32
    %33 = vector.broadcast %c8_i32 : i32 to vector<1x128xi32>
    %34 = arith.cmpi slt, %32, %33 : vector<1x128xi32>
    %cst_10 = arith.constant -1.000000e+30 : f32
    %35 = vector.shape_cast %34 : vector<1x128xi1> to vector<1x128xi1>
    %36 = vector.broadcast %35 : vector<1x128xi1> to vector<16x128xi1>
    %37 = vector.broadcast %cst_10 : f32 to vector<16x128xf32>
    %38 = arith.select %36, %31, %37 : vector<16x128xi1>, vector<16x128xf32>
    %cst_11 = arith.constant dense<0xFF800000> : vector<16xf32>
    %39 = vector.multi_reduction <maximumf>, %38, %cst_11 [1] : vector<16x128xf32> to vector<16xf32>
    %40 = vector.shape_cast %39 : vector<16xf32> to vector<16x1xf32>
    %41 = vector.broadcast %40 : vector<16x1xf32> to vector<16x128xf32>
    %42 = arith.subf %38, %41 : vector<16x128xf32>
    %43 = math.exp %42 : vector<16x128xf32>
    %cst_12 = arith.constant dense<0.000000e+00> : vector<16xf32>
    %44 = vector.multi_reduction <add>, %43, %cst_12 [1] : vector<16x128xf32> to vector<16xf32>
    %45 = vector.shape_cast %44 : vector<16xf32> to vector<16x1xf32>
    %46 = tpu.reciprocal %45 {approx = true} : vector<16x1xf32> -> vector<16x1xf32>
    %47 = vector.broadcast %46 : vector<16x1xf32> to vector<16x128xf32>
    %48 = arith.mulf %43, %47 : vector<16x128xf32>
    %49 = arith.truncf %48 : vector<16x128xf32> to vector<16x128xbf16>
    %cst_13 = arith.constant dense<0.000000e+00> : vector<16x128xf32>
    %50 = tpu.matmul %49, %12, %cst_13 {dimension_numbers = #tpu.dot_dimension_numbers<[1], [0], [0], [1], [0, 0, 1, 1], [], []>} : vector<16x128xbf16>, vector<128x128xbf16>, vector<16x128xf32> -> vector<16x128xf32>
    %cst_14 = arith.constant dense<0xFF800000> : vector<1xf32>
    %51 = vector.multi_reduction <maximumf>, %40, %cst_14 [0] : vector<16x1xf32> to vector<1xf32>
    %52 = vector.shape_cast %51 : vector<1xf32> to vector<1x1xf32>
    %53 = vector.broadcast %52 : vector<1x1xf32> to vector<16x1xf32>
    %54 = arith.subf %40, %53 : vector<16x1xf32>
    %55 = math.exp %54 : vector<16x1xf32>
    %cst_15 = arith.constant dense<0.000000e+00> : vector<1xf32>
    %56 = vector.multi_reduction <add>, %55, %cst_15 [0] : vector<16x1xf32> to vector<1xf32>
    %57 = vector.shape_cast %56 : vector<1xf32> to vector<1x1xf32>
    %58 = tpu.reciprocal %57 {approx = true} : vector<1x1xf32> -> vector<1x1xf32>
    %59 = vector.broadcast %58 : vector<1x1xf32> to vector<16x1xf32>
    %60 = arith.mulf %55, %59 : vector<16x1xf32>
    %cst_16 = arith.constant dense<0.000000e+00> : vector<1x128xf32>
    %61 = tpu.matmul %60, %1, %cst_16 {dimension_numbers = #tpu.dot_dimension_numbers<[0], [0], [1], [1], [0, 1, 1, 1], [], []>} : vector<16x1xf32>, vector<16x128xf32>, vector<1x128xf32> -> vector<1x128xf32>
    %c0_17 = arith.constant 0 : index
    %c0_18 = arith.constant 0 : index
    %c0_19 = arith.constant 0 : index
    %62 = vector.load %arg5[%c0_17, %c0_18, %c0_19] : memref<1x16x512xf32, #tpu.memory_space<vmem>>, vector<1x16x128xf32>
    %63 = vector.shape_cast %62 : vector<1x16x128xf32> to vector<16x128xf32>
    %64 = vector.shape_cast %1 : vector<16x128xf32> to vector<1x16x128xf32>
    tpu.vector_store %arg5[%c0_17, %c0_18, %c0_19], %64 {strides = array<i32>} : memref<1x16x512xf32, #tpu.memory_space<vmem>>, vector<1x16x128xf32>,
    %c0_20 = arith.constant 0 : index
    %c0_21 = arith.constant 0 : index
    %c128 = arith.constant 128 : index
    %65 = vector.load %arg5[%c0_20, %c0_21, %c128] : memref<1x16x512xf32, #tpu.memory_space<vmem>>, vector<1x16x128xf32>
    %66 = vector.shape_cast %65 : vector<1x16x128xf32> to vector<16x128xf32>
    %67 = vector.shape_cast %50 : vector<16x128xf32> to vector<1x16x128xf32>
    tpu.vector_store %arg5[%c0_20, %c0_21, %c128], %67 {strides = array<i32>} : memref<1x16x512xf32, #tpu.memory_space<vmem>>, vector<1x16x128xf32>,
    %68 = arith.mulf %1, %50 : vector<16x128xf32>
    %c0_22 = arith.constant 0 : index
    %c0_23 = arith.constant 0 : index
    %c256 = arith.constant 256 : index
    %69 = vector.load %arg5[%c0_22, %c0_23, %c256] : memref<1x16x512xf32, #tpu.memory_space<vmem>>, vector<1x16x128xf32>
    %70 = vector.shape_cast %69 : vector<1x16x128xf32> to vector<16x128xf32>
    %71 = vector.shape_cast %68 : vector<16x128xf32> to vector<1x16x128xf32>
    tpu.vector_store %arg5[%c0_22, %c0_23, %c256], %71 {strides = array<i32>} : memref<1x16x512xf32, #tpu.memory_space<vmem>>, vector<1x16x128xf32>,
    %72 = vector.broadcast %61 : vector<1x128xf32> to vector<16x128xf32>
    %73 = arith.mulf %1, %72 : vector<16x128xf32>
    %c0_24 = arith.constant 0 : index
    %c0_25 = arith.constant 0 : index
    %c384 = arith.constant 384 : index
    %74 = vector.load %arg5[%c0_24, %c0_25, %c384] : memref<1x16x512xf32, #tpu.memory_space<vmem>>, vector<1x16x128xf32>
    %75 = vector.shape_cast %74 : vector<1x16x128xf32> to vector<16x128xf32>
    %76 = vector.shape_cast %73 : vector<16x128xf32> to vector<1x16x128xf32>
    tpu.vector_store %arg5[%c0_24, %c0_25, %c384], %76 {strides = array<i32>} : memref<1x16x512xf32, #tpu.memory_space<vmem>>, vector<1x16x128xf32>,
    return
  }
  func.func @transform_0(%arg0: i32) -> (i32, i32, i32) {
    %c0_i32 = arith.constant 0 : i32
    %c0_i32_0 = arith.constant 0 : i32
    %c0_i32_1 = arith.constant 0 : i32
    return %arg0, %c0_i32, %c0_i32_0 : i32, i32, i32
  }
  func.func @transform_1(%arg0: i32) -> (i32, i32, i32) {
    %c0_i32 = arith.constant 0 : i32
    %c0_i32_0 = arith.constant 0 : i32
    %c0_i32_1 = arith.constant 0 : i32
    return %arg0, %c0_i32, %c0_i32_0 : i32, i32, i32
  }
  func.func @transform_2(%arg0: i32) -> (i32, i32) {
    %c0_i32 = arith.constant 0 : i32
    %c0_i32_0 = arith.constant 0 : i32
    %c0_i32_1 = arith.constant 0 : i32
    return %c0_i32, %c0_i32_0 : i32, i32
  }
  func.func @transform_3(%arg0: i32) -> i32 {
    %c0_i32 = arith.constant 0 : i32
    %c0_i32_0 = arith.constant 0 : i32
    return %c0_i32 : i32
  }
  func.func @transform_4(%arg0: i32) -> (i32, i32, i32) {
    %c0_i32 = arith.constant 0 : i32
    %c0_i32_0 = arith.constant 0 : i32
    %c0_i32_1 = arith.constant 0 : i32
    return %arg0, %c0_i32, %c0_i32_0 : i32, i32, i32
  }
}

</mosaic_0001>

<llo_original>
// kernel: tpu_custom_call.1
$region0: #{tpu_custom_call.1}
  #allocation0 [shape = 'u32[]', space=smem, size = 0x4, offset = 0x4, fixed_abs, tag = 'smem constant byte address 0x4 - core index']
  #allocation1 [shape = 'u32[72,128]{1,0:T(1,128)}', space=vmem, size = 0x9000, scoped, tag = 'internal scratch']
  %s0 = inlined_call_operand.hbm [shape: f32[2,16,128], index: 0, kind: input, shape index: {}]
  %s1 = inlined_call_operand.hbm [shape: f32[2,128,128], index: 1, kind: input, shape index: {}]
  %s2 = inlined_call_operand.hbm [shape: f32[3,128], index: 2, kind: input, shape index: {}]
  %s3 = inlined_call_operand.vmem [shape: f32[3], index: 3, kind: input, shape index: {}]
  %s4 = inlined_call_operand.hbm [shape: f32[2,16,512], index: 4, kind: output, shape index: {}]
  %s5 = sld [smem:[#allocation0]]
  $region65: #{tpu_custom_call.1} parent=0
    _
  %s7 = ssub.s32 1, %s5
  %s8 = scalar_select 0, %s7, %s5
  $region1: #{tpu_custom_call.1} parent=0
    #allocation2 [shape = 'u8[16384]{0}', space=vmem, size = 0x4000, scoped, tag = 'input window, operand 0']
    #allocation3 [shape = 's32[2]{0}', space=sflag, size = 0x8, scoped, tag = 'scoped memory for tpu_custom_call.1']
    #allocation4 [shape = 's32[2]{0}', space=sflag, size = 0x8, scoped, tag = 'scoped memory for tpu_custom_call.1']
    #allocation5 [shape = 's32[2]{0}', space=sflag, size = 0x8, scoped, tag = 'scoped memory for tpu_custom_call.1']
    #allocation6 [shape = 'u8[131072]{0}', space=vmem, size = 0x20000, scoped, tag = 'input window, operand 1']
    #allocation7 [shape = 's32[2]{0}', space=sflag, size = 0x8, scoped, tag = 'scoped memory for tpu_custom_call.1']
    #allocation8 [shape = 'u8[2048]{0}', space=vmem, size = 0x800, scoped, tag = 'input window, operand 2, single buffered']
    #allocation9 [shape = 'u8[512]{0}', space=smem, size = 0x200, scoped, tag = 'input window, operand 3, single buffered']
    #allocation10 [shape = 'u8[65536]{0}', space=vmem, size = 0x10000, scoped, tag = 'output window, operand 0']
    %9 = vsyncpa [#allocation3], 0
    %s10 = scalar_lea.sflag [#allocation3], 1
    %11 = vsyncpa %s10, 0
    %12 = vsyncpa [#allocation7], 0
    %s13 = scalar_lea.sflag [#allocation7], 1
    %14 = vsyncpa %s13, 0
    %15 = vsyncpa [#allocation5], 0
    %16 = vsyncpa [#allocation4], 0
    %s17 = scalar_lea.sflag [#allocation4], 1
    %18 = vsyncpa %s17, 0
    loop: start=0, step=1, limit=4
    $region2: #{tpu_custom_call.1} parent=1 // loop_pre_header
      _
    $region3: #{tpu_custom_call.1} parent=1 // loop_header
      %s20 = sphi 0, %s24
      %p21 = scmp.ge.s32.totalorder %s20, 4
      %s30 = sphi 0, %s32
      %s33 = sphi 0, %s30
      %s34 = sphi 0, %s33
      %s50 = sphi 0, %s34
      %s56 = sphi 0, %s58
      %s59 = sphi 0, %s56
      %s60 = sphi 0, %s59
      %s76 = sphi 0, %s60
      %s80 = sphi 0, %s80
      %s82 = sphi 0, %s80
      %s83 = sphi 0, %s82
      %s97 = sphi 0, %s83
      %s101 = sphi 0, %s101
      %s103 = sphi 0, %s101
      %s104 = sphi 0, %s103
      %s118 = sphi 0, %s104
      %s124 = sphi 0, %s126
      %s127 = sphi 0, %s124
      %s128 = sphi 0, %s127
      %s144 = sphi 0, %s128
    $region4: #{tpu_custom_call.1} parent=1 // loop_header_branch
      %23 = sbr.rel (%p21) target = $region8
    $region5: #{tpu_custom_call.1} parent=1 // loop_body
      %s25 = ssub.s32 %s20, 1
      %s26 = ssub.s32 %s20, 2
      %s27 = sadd.s32 %s20, 1
      %s28 = ssub.s32 %s20, %s27
      %p29 = scmp.eq.s32.totalorder %s28, 0
      %s31 = sadd.s32 %s30, 1
      %s32 = scalar_select %p29, %s30, %s31
      %p35 = pneg %p29
      %p36 = scmp.eq.s32.totalorder %s20, 1
      %p37 = por %p35, %p36
      %p38 = scmp.ne.s32.totalorder %s30, %s33
      %p39 = scmp.eq.s32.totalorder %s20, 0
      %p40 = por %p38, %p39
      %p41 = scmp.ne.s32.totalorder %s30, %s33
      %p42 = scmp.eq.s32.totalorder %s25, 1
      %p43 = por %p41, %p42
      %p44 = scmp.ne.s32.totalorder %s33, %s34
      %p45 = scmp.eq.s32.totalorder %s25, 0
      %p46 = por %p44, %p45
      %p47 = scmp.ne.s32.totalorder %s33, %s34
      %p48 = scmp.eq.s32.totalorder %s26, 1
      %p49 = por %p47, %p48
      %p51 = scmp.ne.s32.totalorder %s34, %s50
      %p52 = scmp.eq.s32.totalorder %s26, 0
      %p53 = por %p51, %p52
      %s54 = ssub.s32 %s20, %s27
      %p55 = scmp.eq.s32.totalorder %s54, 0
      %s57 = sadd.s32 %s56, 1
      %s58 = scalar_select %p55, %s56, %s57
      %p61 = pneg %p55
      %p62 = scmp.eq.s32.totalorder %s20, 1
      %p63 = por %p61, %p62
      %p64 = scmp.ne.s32.totalorder %s56, %s59
      %p65 = scmp.eq.s32.totalorder %s20, 0
      %p66 = por %p64, %p65
      %p67 = scmp.ne.s32.totalorder %s56, %s59
      %p68 = scmp.eq.s32.totalorder %s25, 1
      %p69 = por %p67, %p68
      %p70 = scmp.ne.s32.totalorder %s59, %s60
      %p71 = scmp.eq.s32.totalorder %s25, 0
      %p72 = por %p70, %p71
      %p73 = scmp.ne.s32.totalorder %s59, %s60
      %p74 = scmp.eq.s32.totalorder %s26, 1
      %p75 = por %p73, %p74
      %p77 = scmp.ne.s32.totalorder %s60, %s76
      %p78 = scmp.eq.s32.totalorder %s26, 0
      %p79 = por %p77, %p78
      %s81 = sadd.s32 %s80, 1
      %p84 = scmp.eq.s32.totalorder %s20, 1
      %p85 = scmp.ne.s32.totalorder %s80, %s82
      %p86 = scmp.eq.s32.totalorder %s20, 0
      %p87 = por %p85, %p86
      %p88 = scmp.ne.s32.totalorder %s80, %s82
      %p89 = scmp.eq.s32.totalorder %s25, 1
      %p90 = por %p88, %p89
      %p91 = scmp.ne.s32.totalorder %s82, %s83
      %p92 = scmp.eq.s32.totalorder %s25, 0
      %p93 = por %p91, %p92
      %p94 = scmp.ne.s32.totalorder %s82, %s83
      %p95 = scmp.eq.s32.totalorder %s26, 1
      %p96 = por %p94, %p95
      %p98 = scmp.ne.s32.totalorder %s83, %s97
      %p99 = scmp.eq.s32.totalorder %s26, 0
      %p100 = por %p98, %p99
      %s102 = sadd.s32 %s101, 1
      %p105 = scmp.eq.s32.totalorder %s20, 1
      %p106 = scmp.ne.s32.totalorder %s101, %s103
      %p107 = scmp.eq.s32.totalorder %s20, 0
      %p108 = por %p106, %p107
      %p109 = scmp.ne.s32.totalorder %s101, %s103
      %p110 = scmp.eq.s32.totalorder %s25, 1
      %p111 = por %p109, %p110
      %p112 = scmp.ne.s32.totalorder %s103, %s104
      %p113 = scmp.eq.s32.totalorder %s25, 0
      %p114 = por %p112, %p113
      %p115 = scmp.ne.s32.totalorder %s103, %s104
      %p116 = scmp.eq.s32.totalorder %s26, 1
      %p117 = por %p115, %p116
      %p119 = scmp.ne.s32.totalorder %s104, %s118
      %p120 = scmp.eq.s32.totalorder %s26, 0
      %p121 = por %p119, %p120
      %s122 = ssub.s32 %s20, %s27
      %p123 = scmp.eq.s32.totalorder %s122, 0
      %s125 = sadd.s32 %s124, 1
      %s126 = scalar_select %p123, %s124, %s125
      %p129 = pneg %p123
      %p130 = scmp.eq.s32.totalorder %s20, 1
      %p131 = por %p129, %p130
      %p132 = scmp.ne.s32.totalorder %s124, %s127
      %p133 = scmp.eq.s32.totalorder %s20, 0
      %p134 = por %p132, %p133
      %p135 = scmp.ne.s32.totalorder %s124, %s127
      %p136 = scmp.eq.s32.totalorder %s25, 1
      %p137 = por %p135, %p136
      %p138 = scmp.ne.s32.totalorder %s127, %s128
      %p139 = scmp.eq.s32.totalorder %s25, 0
      %p140 = por %p138, %p139
      %p141 = scmp.ne.s32.totalorder %s127, %s128
      %p142 = scmp.eq.s32.totalorder %s26, 1
      %p143 = por %p141, %p142
      %p145 = scmp.ne.s32.totalorder %s128, %s144
      %p146 = scmp.eq.s32.totalorder %s26, 0
      %p147 = por %p145, %p146
      %p148 = scmp.le.s32.totalorder 1, %s20
      %p149 = scmp.lt.s32.totalorder %s20, 3
      %p150 = pnand %p148, %p149
      %p151 = pneg %p150
      // Predicated region
      $region9: #{tpu_custom_call.1} parent=5 // pred_check
        _
      $region10: #{tpu_custom_call.1} parent=5 // pred_check_branch
        %153 = sbr.rel (%p150) target = $region12
      $region11: #{tpu_custom_call.1} parent=5 // pred_region
        %s154 = ssub.s32 %s20, 1
        // Predicated region
        $region13: #{tpu_custom_call.1} parent=11 // pred_check
          %p155 = pneg %p93
        $region14: #{tpu_custom_call.1} parent=11 // pred_check_branch
          %157 = sbr.rel (%p155) target = $region16
        $region15: #{tpu_custom_call.1} parent=11 // pred_region
          %159 = vsyncadd [#allocation7], 0
          %s161 = sshll.u32 %s2, 4
          %s162 = int_to_ptr.hbm [resolvable:$true] %s161
          %s163 = sshll.u32 [#allocation8], 4
          %s164 = int_to_ptr.vmem [resolvable:$true] %s163
          %166 = dma.hbm_to_vmem [thread:$0]  %s162, 64, %s164, [#allocation7]
        $region16: #{tpu_custom_call.1} parent=11 // pred_fallthru
          _
        // Predicated region
        $region17: #{tpu_custom_call.1} parent=11 // pred_check
          %p167 = pneg %p114
        $region18: #{tpu_custom_call.1} parent=11 // pred_check_branch
          %169 = sbr.rel (%p167) target = $region20
        $region19: #{tpu_custom_call.1} parent=11 // pred_region
          %171 = vsyncadd [#allocation5], 0
          %s173 = sshll.u32 %s3, 4
          %s174 = int_to_ptr.vmem [resolvable:$true] %s173
          %176 = dma.vmem_to_smem %s174, 16, [#allocation9], [#allocation5]
        $region20: #{tpu_custom_call.1} parent=11 // pred_fallthru
          _
      $region12: #{tpu_custom_call.1} parent=5 // pred_fallthru
        _
      %p177 = scmp.lt.s32.totalorder %s20, 2
      // Predicated region
      $region21: #{tpu_custom_call.1} parent=5 // pred_check
        %p178 = pneg %p177
      $region22: #{tpu_custom_call.1} parent=5 // pred_check_branch
        %180 = sbr.rel (%p178) target = $region24
      $region23: #{tpu_custom_call.1} parent=5 // pred_region
        // Predicated region
        $region25: #{tpu_custom_call.1} parent=23 // pred_check
          %p181 = pneg %p40
        $region26: #{tpu_custom_call.1} parent=23 // pred_check_branch
          %183 = sbr.rel (%p181) target = $region28
        $region27: #{tpu_custom_call.1} parent=23 // pred_region
          %s184 = sand.u32 %s30, 1
          %s185 = scalar_lea.sflag [#allocation3], %s184
          %s186 = sand.u32 %s30, 1
          %s187 = smul.addr %s186, 16
          %s188 = scalar_lea.vmem [#allocation2], %s187
          %190 = vsyncadd %s185, 0
          %s191 = smul.addr %s20, 2
          %s192 = smul.addr %s191, 8
          %s193 = scalar_lea.hbm %s0, %s192
          %s194 = sshll.u32 %s193, 4
          %s195 = int_to_ptr.hbm [resolvable:$true] %s194
          %s196 = sshll.u32 %s188, 4
          %s197 = int_to_ptr.vmem [resolvable:$true] %s196
          %202 = dma.hbm_to_vmem [thread:$0]  %s195, 256, %s197, %s185, 128, 128, 8
        $region28: #{tpu_custom_call.1} parent=23 // pred_fallthru
          _
        // Predicated region
        $region29: #{tpu_custom_call.1} parent=23 // pred_check
          %p203 = pneg %p66
        $region30: #{tpu_custom_call.1} parent=23 // pred_check_branch
          %205 = sbr.rel (%p203) target = $region32
        $region31: #{tpu_custom_call.1} parent=23 // pred_region
          %s206 = sand.u32 %s20, 1
          %s207 = scalar_lea.sflag [#allocation7], %s206
          %s208 = sand.u32 %s56, 1
          %s209 = smul.addr %s208, 128
          %s210 = scalar_lea.vmem [#allocation6], %s209
          %212 = vsyncadd %s207, 0
          %s213 = smul.addr %s20, 16
          %s214 = smul.addr %s213, 8
          %s215 = scalar_lea.hbm %s1, %s214
          %s216 = sshll.u32 %s215, 4
          %s217 = int_to_ptr.hbm [resolvable:$true] %s216
          %s218 = sshll.u32 %s210, 4
          %s219 = int_to_ptr.vmem [resolvable:$true] %s218
          %224 = dma.hbm_to_vmem [thread:$0]  %s217, 2048, %s219, %s207, 128, 128, 8
        $region32: #{tpu_custom_call.1} parent=23 // pred_fallthru
          _
      $region24: #{tpu_custom_call.1} parent=5 // pred_fallthru
        _
      %p225 = scmp.le.s32.totalorder 1, %s20
      %p226 = scmp.lt.s32.totalorder %s20, 3
      %p227 = pnand %p225, %p226
      %p228 = pneg %p227
      // Predicated region
      $region33: #{tpu_custom_call.1} parent=5 // pred_check
        _
      $region34: #{tpu_custom_call.1} parent=5 // pred_check_branch
        %230 = sbr.rel (%p227) target = $region36
      $region35: #{tpu_custom_call.1} parent=5 // pred_region
        %s231 = ssub.s32 %s20, 1
        %s232 = sand.u32 %s33, 1
        %s233 = scalar_lea.sflag [#allocation3], %s232
        %s234 = sand.u32 %s33, 1
        %s235 = smul.addr %s234, 16
        %s236 = scalar_lea.vmem [#allocation2], %s235
        // Predicated region
        $region37: #{tpu_custom_call.1} parent=35 // pred_check
          %p237 = pneg %p46
        $region38: #{tpu_custom_call.1} parent=35 // pred_check_branch
          %239 = sbr.rel (%p237) target = $region40
        $region39: #{tpu_custom_call.1} parent=35 // pred_region
          %241 = dma.done %s233, 256
        $region40: #{tpu_custom_call.1} parent=35 // pred_fallthru
          _
        %s242 = sand.u32 %s25, 1
        %s243 = scalar_lea.sflag [#allocation7], %s242
        %s244 = sand.u32 %s59, 1
        %s245 = smul.addr %s244, 128
        %s246 = scalar_lea.vmem [#allocation6], %s245
        // Predicated region
        $region41: #{tpu_custom_call.1} parent=35 // pred_check
          %p247 = pneg %p72
        $region42: #{tpu_custom_call.1} parent=35 // pred_check_branch
          %249 = sbr.rel (%p247) target = $region44
        $region43: #{tpu_custom_call.1} parent=35 // pred_region
          %251 = dma.done %s243, 2048
        $region44: #{tpu_custom_call.1} parent=35 // pred_fallthru
          _
        // Predicated region
        $region45: #{tpu_custom_call.1} parent=35 // pred_check
          %p252 = pneg %p93
        $region46: #{tpu_custom_call.1} parent=35 // pred_check_branch
          %254 = sbr.rel (%p252) target = $region48
        $region47: #{tpu_custom_call.1} parent=35 // pred_region
          %256 = dma.done [#allocation7], 64
        $region48: #{tpu_custom_call.1} parent=35 // pred_fallthru
          _
        // Predicated region
        $region49: #{tpu_custom_call.1} parent=35 // pred_check
          %p257 = pneg %p114
        $region50: #{tpu_custom_call.1} parent=35 // pred_check_branch
          %259 = sbr.rel (%p257) target = $region52
        $region51: #{tpu_custom_call.1} parent=35 // pred_region
          %261 = dma.done [#allocation5], 16
        $region52: #{tpu_custom_call.1} parent=35 // pred_fallthru
          _
        %262 = sfence
        %s263 = sand.u32 %s33, 1
        %s264 = scalar_lea.sflag [#allocation3], %s263
        %s265 = sand.u32 %s33, 1
        %s266 = smul.addr %s265, 16
        %s267 = scalar_lea.vmem [#allocation2], %s266
        %p268 = pneg %p46
        %p269 = pneg %p43
        %s270 = sand.u32 %s25, 1
        %s271 = scalar_lea.sflag [#allocation7], %s270
        %s272 = sand.u32 %s59, 1
        %s273 = smul.addr %s272, 128
        %s274 = scalar_lea.vmem [#allocation6], %s273
        %p275 = pneg %p72
        %p276 = pneg %p69
        %p277 = pneg %p93
        %p278 = pneg %p90
        %p279 = pneg %p114
        %p280 = pneg %p111
        %p281 = pneg %p140
        %p282 = pneg %p137
        %s283 = sand.u32 %s127, 1
        %s284 = scalar_lea.sflag [#allocation4], %s283
        %s285 = sand.u32 %s127, 1
        %s286 = smul.addr %s285, 64
        %s287 = scalar_lea.vmem [#allocation10], %s286
        %v288 = vld [vmem:[%s236] sm:$0xff]
        %v289 = vld [vmem:[%s236 + $0x8] sm:$0xff]
        %v290 = vld [vmem:[%s246] sm:$0xff]
        %v291 = vld [vmem:[%s246 + $0x8] sm:$0xff]
        %v292 = vld [vmem:[%s246 + $0x10] sm:$0xff]
        %v293 = vld [vmem:[%s246 + $0x18] sm:$0xff]
        %v294 = vld [vmem:[%s246 + $0x20] sm:$0xff]
        %v295 = vld [vmem:[%s246 + $0x28] sm:$0xff]
        %v296 = vld [vmem:[%s246 + $0x30] sm:$0xff]
        %v297 = vld [vmem:[%s246 + $0x38] sm:$0xff]
        %v298 = vld [vmem:[%s246 + $0x40] sm:$0xff]
        %v299 = vld [vmem:[%s246 + $0x48] sm:$0xff]
        %v300 = vld [vmem:[%s246 + $0x50] sm:$0xff]
        %v301 = vld [vmem:[%s246 + $0x58] sm:$0xff]
        %v302 = vld [vmem:[%s246 + $0x60] sm:$0xff]
        %v303 = vld [vmem:[%s246 + $0x68] sm:$0xff]
        %v304 = vld [vmem:[%s246 + $0x70] sm:$0xff]
        %v305 = vld [vmem:[%s246 + $0x78] sm:$0xff]
        %v306 = vld [vmem:[#allocation8] sm:$0x7]
        %s307 = sld [smem:[#allocation9]]
        %s308 = sld [smem:[#allocation9 + $0x1]]
        %s309 = sld [smem:[#allocation9 + $0x2]]
        %v310 = vpack.c.bf16 %v289, %v288
        %v311 = vpack.c.bf16 %v291, %v290
        %v312 = vpack.c.bf16 %v293, %v292
        %v313 = vpack.c.bf16 %v295, %v294
        %v314 = vpack.c.bf16 %v297, %v296
        %v315 = vpack.c.bf16 %v299, %v298
        %v316 = vpack.c.bf16 %v301, %v300
        %v317 = vpack.c.bf16 %v303, %v302
        %v318 = vpack.c.bf16 %v305, %v304
        %v319 = vperm.slane %v306, 0
        %v320 = vmul.f32 %v288, %v319
        %v321 = vmul.f32 %v289, %v319
        %322 = vadd.xlane.f32.xlu0 %v320
        %v323 = vpop.xlane.xlu0 %322
        %324 = vadd.xlane.f32.xlu0 %v321
        %v325 = vpop.xlane.xlu0 %324
        %v326 = vstv %s307
        %v327 = vadd.f32 %v323, %v326
        %v328 = vadd.f32 %v325, %v326
        %v329 = vstv %s308
        %v331 = vrot.slane %v306, 1
        %333 = vmatpush.xpose.msra.mxu0 %v305
        %334 = vmatpush.xpose.msra.mxu0 %v304
        %335 = vmatpush.xpose.msra.mxu0 %v303
        %336 = vmatpush.xpose.msra.mxu0 %v302
        %337 = vmatpush.xpose.msra.mxu0 %v301
        %338 = vmatpush.xpose.msra.mxu0 %v300
        %339 = vmatpush.xpose.msra.mxu0 %v299
        %340 = vmatpush.xpose.msra.mxu0 %v298
        %341 = vmatpush.xpose.msra.mxu0 %v297
        %342 = vmatpush.xpose.msra.mxu0 %v296
        %343 = vmatpush.xpose.msra.mxu0 %v295
        %344 = vmatpush.xpose.msra.mxu0 %v294
        %345 = vmatpush.xpose.msra.mxu0 %v293
        %346 = vmatpush.xpose.msra.mxu0 %v292
        %347 = vmatpush.xpose.msra.mxu0 %v291
        %348 = vmatpush.xpose.msra.mxu0 %v290
        %349 = vmatmul.f32.gmra.mxu0 %v331
        %v350 = vpop.f32.mrf.mxu0
        %v351 = vadd.f32 %v329, %v350
        %352 = vdwg.mxu0
        %v353 = vperm.slane %v306, 2
        %v354 = vmul.f32 %v290, %v353
        %v355 = vmul.f32 %v291, %v353
        %v356 = vmul.f32 %v292, %v353
        %v357 = vmul.f32 %v293, %v353
        %v358 = vmul.f32 %v294, %v353
        %v359 = vmul.f32 %v295, %v353
        %v360 = vmul.f32 %v296, %v353
        %v361 = vmul.f32 %v297, %v353
        %v362 = vmul.f32 %v298, %v353
        %v363 = vmul.f32 %v299, %v353
        %v364 = vmul.f32 %v300, %v353
        %v365 = vmul.f32 %v301, %v353
        %v366 = vmul.f32 %v302, %v353
        %v367 = vmul.f32 %v303, %v353
        %v368 = vmul.f32 %v304, %v353
        %v369 = vmul.f32 %v305, %v353
        %v370 = vpack.c.bf16 %v355, %v354
        %v371 = vpack.c.bf16 %v357, %v356
        %v372 = vpack.c.bf16 %v359, %v358
        %v373 = vpack.c.bf16 %v361, %v360
        %v374 = vpack.c.bf16 %v363, %v362
        %v375 = vpack.c.bf16 %v365, %v364
        %v376 = vpack.c.bf16 %v367, %v366
        %v377 = vpack.c.bf16 %v369, %v368
        %v378 = vstv %s309
        %379 = vmatpush.bf16.xpose.msra.mxu0 %v377
        %380 = vmatpush.bf16.xpose.msra.mxu0 %v376
        %381 = vmatpush.bf16.xpose.msra.mxu0 %v375
        %382 = vmatpush.bf16.xpose.msra.mxu0 %v374
        %383 = vmatpush.bf16.xpose.msra.mxu0 %v373
        %384 = vmatpush.bf16.xpose.msra.mxu0 %v372
        %385 = vmatpush.bf16.xpose.msra.mxu0 %v371
        %386 = vmatpush.bf16.xpose.msra.mxu0 %v370
        %387 = vmatmul.bf16.gmra.mxu0 %v310
        %v388 = vpop.f32.mrf.mxu0
        %v389 = vadd.f32 %v378, %v388
        %v390 = vpop.f32.mrf.mxu0
        %v391 = vadd.f32 %v378, %v390
        %392 = vdwg.mxu0
        %v393 = vadd.f32 %v389, %v327
        %v394 = vadd.f32 %v391, %v328
        %v395 = vperm.slane %v351, 0
        %v396 = vadd.f32 %v393, %v395
        %v397 = vadd.f32 %v394, %v395
        %v398 = vlaneseq
        %v399 = vand.u32 %v398, 127
        %vm400 = vcmp.lt.s32.totalorder %v399, 8
        %v401 = vsel %vm400, 1, 0
        %vm402 = vcmp.eq.s32.totalorder %v401, 1
        %v403 = vsel %vm402, %v396, -1e+30
        %v404 = vsel %vm402, %v397, -1e+30
        %405 = vmax.xlane.f32.xlu0 %v403
        %v406 = vpop.xlane.xlu0 %405
        %407 = vmax.xlane.f32.xlu0 %v404
        %v408 = vpop.xlane.xlu0 %407
        %v409 = vsub.f32 %v403, %v406
        %v410 = vsub.f32 %v404, %v408
        %v411 = vmul.f32 %v409, 1.442695
        %v412 = vpow.pop %v411
        %v413 = vmul.f32 %v410, 1.442695
        %v414 = vpow.pop %v413
        %415 = vadd.xlane.f32.xlu0 %v412
        %v416 = vpop.xlane.xlu0 %415
        %417 = vadd.xlane.f32.xlu0 %v414
        %v418 = vpop.xlane.xlu0 %417
        %v419 = vrcp.pop %v416
        %v420 = vrcp.pop %v418
        %v421 = vmul.f32 %v412, %v419
        %v422 = vmul.f32 %v414, %v420
        %v423 = vpack.c.bf16 %v422, %v421
        %424 = vmatpush.bf16.msra.mxu0 %v318
        %425 = vmatpush.bf16.msra.mxu0 %v317
        %426 = vmatpush.bf16.msra.mxu0 %v316
        %427 = vmatpush.bf16.msra.mxu0 %v315
        %428 = vmatpush.bf16.msra.mxu0 %v314
        %429 = vmatpush.bf16.msra.mxu0 %v313
        %430 = vmatpush.bf16.msra.mxu0 %v312
        %431 = vmatpush.bf16.msra.mxu0 %v311
        %432 = vmatmul.bf16.gmra.mxu0 %v423
        %v433 = vpop.f32.mrf.mxu0
        %v434 = vadd.f32 0.0, %v433
        %v435 = vpop.f32.mrf.mxu0
        %v436 = vadd.f32 0.0, %v435
        %437 = vdwg.mxu0
        %v438 = vmax.f32 %v406, %v408
        %v439 = vrot.slane %v438, 4
        %v440 = vmax.f32 %v438, %v439
        %v441 = vrot.slane %v440, 2
        %v442 = vmax.f32 %v440, %v441
        %v443 = vrot.slane %v442, 1
        %v444 = vmax.f32 %v442, %v443
        %v445 = vsub.f32 %v406, %v444
        %v446 = vsub.f32 %v408, %v444
        %v447 = vmul.f32 %v445, 1.442695
        %v448 = vpow.pop %v447
        %v449 = vmul.f32 %v446, 1.442695
        %v450 = vpow.pop %v449
        %v451 = vadd.f32 %v448, %v450
        %v452 = vrot.slane %v451, 4
        %v453 = vadd.f32 %v451, %v452
        %v454 = vrot.slane %v453, 2
        %v455 = vadd.f32 %v453, %v454
        %v456 = vrot.slane %v455, 1
        %v457 = vadd.f32 %v455, %v456
        %v458 = vrcp.pop %v457
        %v459 = vmul.f32 %v448, %v458
        %v460 = vmul.f32 %v450, %v458
        %461 = vxpose.xlu0.b32.start [1/16] %v459, 128
        %462 = vxpose.xlu0.b32.cont [2/16] %v460, 128
        %463 = vxpose.xlu0.b32.cont [3/16] 0.0, 128
        %464 = vxpose.xlu0.b32.cont [4/16] 0.0, 128
        %465 = vxpose.xlu0.b32.cont [5/16] 0.0, 128
        %466 = vxpose.xlu0.b32.cont [6/16] 0.0, 128
        %467 = vxpose.xlu0.b32.cont [7/16] 0.0, 128
        %468 = vxpose.xlu0.b32.cont [8/16] 0.0, 128
        %469 = vxpose.xlu0.b32.cont [9/16] 0.0, 128
        %470 = vxpose.xlu0.b32.cont [10/16] 0.0, 128
        %471 = vxpose.xlu0.b32.cont [11/16] 0.0, 128
        %472 = vxpose.xlu0.b32.cont [12/16] 0.0, 128
        %473 = vxpose.xlu0.b32.cont [13/16] 0.0, 128
        %474 = vxpose.xlu0.b32.cont [14/16] 0.0, 128
        %475 = vxpose.xlu0.b32.cont [15/16] 0.0, 128
        %476 = vxpose.xlu0.b32.end [16/16] 0.0, 128
        %v477 = vpop.trf.xlu0
        %v478 = vpop.trf.xlu0
        %v479 = vpop.trf.xlu0
        %v480 = vpop.trf.xlu0
        %v481 = vpop.trf.xlu0
        %v482 = vpop.trf.xlu0
        %v483 = vpop.trf.xlu0
        %v484 = vpop.trf.xlu0
        %v485 = vpop.trf.xlu0
        %v486 = vpop.trf.xlu0
        %v487 = vpop.trf.xlu0
        %v488 = vpop.trf.xlu0
        %v489 = vpop.trf.xlu0
        %v490 = vpop.trf.xlu0
        %v491 = vpop.trf.xlu0
        %v492 = vpop.trf.xlu0
        %vm493 = vcmask 130048
        %v495 = vsel %vm493, %v477, 0
        %497 = vmatpush.msra.mxu0 0.0
        %498 = vmatpush.msra.mxu0 0.0
        %499 = vmatpush.msra.mxu0 0.0
        %500 = vmatpush.msra.mxu0 0.0
        %501 = vmatpush.msra.mxu0 0.0
        %502 = vmatpush.msra.mxu0 0.0
        %503 = vmatpush.msra.mxu0 0.0
        %504 = vmatpush.msra.mxu0 0.0
        %505 = vmatpush.msra.mxu0 0.0
        %506 = vmatpush.msra.mxu0 0.0
        %507 = vmatpush.msra.mxu0 0.0
        %508 = vmatpush.msra.mxu0 0.0
        %509 = vmatpush.msra.mxu0 0.0
        %510 = vmatpush.msra.mxu0 0.0
        %511 = vmatpush.msra.mxu0 %v289
        %512 = vmatpush.msra.mxu0 %v288
        %513 = vmatmul.f32.gmra.mxu0 %v495
        %v514 = vpop.f32.mrf.mxu0
        %v515 = vadd.f32 0.0, %v514
        %516 = vdwg.mxu0
        %517 = vst [vmem:[%s287] sm:$0xff] %v288
        %518 = vst [vmem:[%s287 + $0x20] sm:$0xff] %v289
        %519 = vst [vmem:[%s287 + $0x8] sm:$0xff] %v434
        %520 = vst [vmem:[%s287 + $0x28] sm:$0xff] %v436
        %v521 = vmul.f32 %v288, %v434
        %v522 = vmul.f32 %v289, %v436
        %523 = vst [vmem:[%s287 + $0x10] sm:$0xff] %v521
        %524 = vst [vmem:[%s287 + $0x30] sm:$0xff] %v522
        %v525 = vperm.slane %v515, 0
        %v526 = vmul.f32 %v288, %v525
        %v527 = vmul.f32 %v289, %v525
        %528 = vst [vmem:[%s287 + $0x18] sm:$0xff] %v526
        %529 = vst [vmem:[%s287 + $0x38] sm:$0xff] %v527
        %s530 = sand.u32 %s127, 1
        %s531 = scalar_lea.sflag [#allocation4], %s530
        %s532 = sand.u32 %s127, 1
        %s533 = smul.addr %s532, 64
        %s534 = scalar_lea.vmem [#allocation10], %s533
        // Predicated region
        $region53: #{tpu_custom_call.1} parent=35 // pred_check
          %p535 = pneg %p137
        $region54: #{tpu_custom_call.1} parent=35 // pred_check_branch
          %537 = sbr.rel (%p535) target = $region56
        $region55: #{tpu_custom_call.1} parent=35 // pred_region
          %539 = vsyncadd %s531, 0
          %s540 = smul.addr %s25, 8
          %s541 = smul.addr %s540, 8
          %s542 = scalar_lea.hbm %s4, %s541
          %s543 = sshll.u32 %s534, 4
          %s544 = int_to_ptr.vmem [resolvable:$true] %s543
          %s545 = sshll.u32 %s542, 4
          %s546 = int_to_ptr.hbm [resolvable:$true] %s545
          %551 = dma.vmem_to_hbm [thread:$0]  %s544, 1024, %s546, %s531, 512, 512, 32
        $region56: #{tpu_custom_call.1} parent=35 // pred_fallthru
          _
      $region36: #{tpu_custom_call.1} parent=5 // pred_fallthru
        _
      %p552 = scmp.le.s32.totalorder 2, %s20
      // Predicated region
      $region57: #{tpu_custom_call.1} parent=5 // pred_check
        %p553 = pneg %p552
      $region58: #{tpu_custom_call.1} parent=5 // pred_check_branch
        %555 = sbr.rel (%p553) target = $region60
      $region59: #{tpu_custom_call.1} parent=5 // pred_region
        %s556 = ssub.s32 %s20, 2
        // Predicated region
        $region61: #{tpu_custom_call.1} parent=59 // pred_check
          %p557 = pneg %p143
        $region62: #{tpu_custom_call.1} parent=59 // pred_check_branch
          %559 = sbr.rel (%p557) target = $region64
        $region63: #{tpu_custom_call.1} parent=59 // pred_region
          %s560 = sand.u32 %s128, 1
          %s561 = scalar_lea.sflag [#allocation4], %s560
          %s562 = sand.u32 %s128, 1
          %s563 = smul.addr %s562, 64
          %s564 = scalar_lea.vmem [#allocation10], %s563
          %566 = dma.done %s561, 1024
        $region64: #{tpu_custom_call.1} parent=59 // pred_fallthru
          _
      $region60: #{tpu_custom_call.1} parent=5 // pred_fallthru
        _
    $region6: #{tpu_custom_call.1} parent=1 // loop_footer
      %s24 = sadd.s32 1, %s20
    $region7: #{tpu_custom_call.1} parent=1 // loop_footer_branch
      %19 = sbr.rel target = $region3
    $region8: #{tpu_custom_call.1} parent=1 // loop_exit
      _
    %567 = vsyncpa [#allocation3], 1
    %s568 = scalar_lea.sflag [#allocation3], 1
    %569 = vsyncpa %s568, 1
    %570 = vsyncpa [#allocation7], 1
    %s571 = scalar_lea.sflag [#allocation7], 1
    %572 = vsyncpa %s571, 1
    %573 = vsyncpa [#allocation4], 1
    %s574 = scalar_lea.sflag [#allocation4], 1
    %575 = vsyncpa %s574, 1
    %576 = vsyncpa [#allocation5], 1
    %s577 = scalar_lea.sflag [#allocation5], 1
    %578 = vsyncpa %s577, 1

</llo_original>
